<compile_context>
chip_gen: v7x
topology: tpu7x:2x2x1
jax: 0.10.0
libtpu: 0.0.40
codegen_flags: <defaults>
</compile_context>

<pallas_src>
import functools

import jax
import jax.numpy as jnp
from jax.experimental import pallas as pl
from jax.experimental.pallas import tpu as pltpu

DP = 128  # lane-dense padded feature width (multiple of 128)


def _round_up(v, m):
    return (v + m - 1) // m * m


# ----------------------------------------------------------------------------
# Fused Pallas kernel: all GCN layers + softmax head in one call
# ----------------------------------------------------------------------------
def _fused_gcn_kernel(*refs, num_layers, layer_dims, head_dims, activation):
    # refs layout: a, x, (w0, b0, w1, b1, ...), wh, bh, out
    a_ref, x_ref = refs[0], refs[1]
    wb_refs = refs[2:2 + 2 * num_layers]
    wh_ref, bh_ref = refs[2 + 2 * num_layers], refs[3 + 2 * num_layers]
    o_ref = refs[4 + 2 * num_layers]

    a = a_ref[...]          # (Np, Np) bf16, resident for all layers
    h = x_ref[...]          # (Np, DP) bf16 hidden state (lives in vregs)

    for li in range(num_layers):
        w = wb_refs[2 * li][...]        # (DP, DP) bf16
        b = wb_refs[2 * li + 1][...]    # (1, DP)  f32
        din, dout = layer_dims[li]
        if din < dout:
            # aggregate on the narrow width first: (A @ H) @ W
            agg = jnp.dot(a, h, preferred_element_type=jnp.float32)
            z = jnp.dot(agg.astype(jnp.bfloat16), w,
                        preferred_element_type=jnp.float32)
        else:
            # transform first: A @ (H @ W)
            hw = jnp.dot(h, w, preferred_element_type=jnp.float32)
            z = jnp.dot(a, hw.astype(jnp.bfloat16),
                        preferred_element_type=jnp.float32)
        z = z + b  # bias broadcast over nodes, f32
        if activation == "relu":
            z = jnp.maximum(z, 0.0)
        elif activation == "sigmoid":
            z = jax.nn.sigmoid(z)
        else:
            raise ValueError(f"Unrecognised activation function {activation}.")
        h = z.astype(jnp.bfloat16)

    # ---- softmax head: softmax(H @ Wh + bh) over the real head_out columns ----
    head_out = head_dims[1]
    logits = jnp.dot(h, wh_ref[...], preferred_element_type=jnp.float32)
    logits = logits + bh_ref[...]
    lane = jax.lax.broadcasted_iota(jnp.int32, logits.shape, 1)
    logits = jnp.where(lane < head_out, logits, -jnp.inf)  # mask padded lanes
    m = jnp.max(logits, axis=-1, keepdims=True)
    e = jnp.exp(logits - m)                                # exp(-inf) -> 0
    denom = jnp.sum(e, axis=-1, keepdims=True)
    o_ref[...] = (e * pl.reciprocal(denom, approx=True)).astype(o_ref.dtype)


# ----------------------------------------------------------------------------
# Wrapper: pad to (8, 128)-aligned layout, cast matmul operands to bf16, one call
# ----------------------------------------------------------------------------
def gcn_forward(params, x, a_hat, activation="relu"):
    n, din0 = x.shape
    np_ = _round_up(max(n, 8), 8)   # sublane-aligned node dim
    num_layers = len(params["gcn"])
    layer_dims = tuple((w.shape[0], w.shape[1]) for (w, _) in params["gcn"])
    wh, bh = params["head"]
    head_dims = (wh.shape[0], wh.shape[1])

    def pad_mat(w):
        return jnp.zeros((DP, DP), jnp.float32).at[: w.shape[0], : w.shape[1]].set(w)

    def pad_bias(b):
        return jnp.zeros((1, DP), jnp.float32).at[0, : b.shape[0]].set(b)

    # Zero-padded rows/cols of A never contaminate real rows (zero columns),
    # so padding is exact for the real node rows.
    a_p = jnp.zeros((np_, np_), jnp.float32).at[:n, :n].set(a_hat).astype(jnp.bfloat16)
    x_p = jnp.zeros((np_, DP), jnp.float32).at[:n, :din0].set(x).astype(jnp.bfloat16)

    args = [a_p, x_p]
    in_specs = [
        pl.BlockSpec((np_, np_), lambda: (0, 0)),
        pl.BlockSpec((np_, DP), lambda: (0, 0)),
    ]
    for (w, b) in params["gcn"]:
        args.append(pad_mat(w).astype(jnp.bfloat16))
        args.append(pad_bias(b))
        in_specs.append(pl.BlockSpec((DP, DP), lambda: (0, 0)))
        in_specs.append(pl.BlockSpec((1, DP), lambda: (0, 0)))
    args.append(pad_mat(wh).astype(jnp.bfloat16))
    args.append(pad_bias(bh))
    in_specs.append(pl.BlockSpec((DP, DP), lambda: (0, 0)))
    in_specs.append(pl.BlockSpec((1, DP), lambda: (0, 0)))

    kernel = functools.partial(
        _fused_gcn_kernel,
        num_layers=num_layers,
        layer_dims=layer_dims,
        head_dims=head_dims,
        activation=activation,
    )

    # Advisory cost estimate (real, unpadded dims).
    flops = 0
    for (di, do) in layer_dims:
        flops += 2 * n * n * min(di, do) + 2 * n * di * do
    flops += 2 * n * head_dims[0] * head_dims[1]
    bytes_accessed = sum(int(a.size) * a.dtype.itemsize for a in args) + np_ * DP * 4
    cost = pl.CostEstimate(
        flops=int(flops),
        transcendentals=int(n * head_dims[1]),
        bytes_accessed=int(bytes_accessed),
    )

    # Everything is resident in VMEM for the whole call; leave headroom but stay
    # within the smallest physical VMEM (v7x: 64 MiB per TensorCore).
    vmem_bytes = 2 * bytes_accessed + (4 << 20)
    vmem_bytes = min(max(vmem_bytes, 32 << 20), 64 << 20)

    out_padded = pl.pallas_call(
        kernel,
        out_shape=jax.ShapeDtypeStruct((np_, DP), jnp.float32),
        in_specs=in_specs,
        out_specs=pl.BlockSpec((np_, DP), lambda: (0, 0)),
        cost_estimate=cost,
        compiler_params=pltpu.CompilerParams(vmem_limit_bytes=int(vmem_bytes)),
    )(*args)
    return out_padded[:n, : head_dims[1]]


# ----------------------------------------------------------------------------
# Glue: normalized adjacency + deterministic parameter init
# ----------------------------------------------------------------------------
def build_normalized_adjacency(edge_index, num_nodes):
    """A_hat = D^{-1/2} (A + I) D^{-1/2}; duplicate edges accumulate (scatter-add),
    self loops are added only for nodes that lack one (add_remaining_self_loops)."""
    src, dst = edge_index[0], edge_index[1]
    a = jnp.zeros((num_nodes, num_nodes), jnp.float32).at[dst, src].add(1.0)
    diag = jnp.diagonal(a)
    a = a + jnp.diag(jnp.where(diag > 0, 0.0, 1.0))
    deg = jnp.sum(a, axis=1)
    dinv = jnp.where(deg > 0, 1.0 / jnp.sqrt(deg), 0.0)
    return dinv[:, None] * a * dinv[None, :]


def xavier_uniform(key, fan_in, fan_out):
    limit = jnp.sqrt(6.0 / (fan_in + fan_out))
    return jax.random.uniform(
        key, (fan_in, fan_out), jnp.float32, minval=-limit, maxval=limit
    )


def init_params(key, dimensions, head_in, head_out):
    params = {"gcn": [], "head": None}
    for i in range(len(dimensions) - 1):
        key, kw = jax.random.split(key)
        w = xavier_uniform(kw, dimensions[i], dimensions[i + 1])
        b = jnp.zeros((dimensions[i + 1],), jnp.float32)
        params["gcn"].append((w, b))
    key, kh = jax.random.split(key)
    wh = xavier_uniform(kh, head_in, head_out)
    bh = jnp.zeros((head_out,), jnp.float32)
    params["head"] = (wh, bh)
    return params


# Pure-JAX reference mirroring the kernel's bf16 matmul operands / f32 accumulate
# (padding with exact zeros does not change the real rows/columns).
def gcn_forward_ref(params, x, a_hat, activation="relu"):
    a = a_hat.astype(jnp.bfloat16)
    h = x.astype(jnp.bfloat16)
    for (w, b) in params["gcn"]:
        din, dout = w.shape
        wb = w.astype(jnp.bfloat16)
        if din < dout:
            agg = jnp.dot(a, h, preferred_element_type=jnp.float32)
            z = jnp.dot(agg.astype(jnp.bfloat16), wb,
                        preferred_element_type=jnp.float32)
        else:
            hw = jnp.dot(h, wb, preferred_element_type=jnp.float32)
            z = jnp.dot(a, hw.astype(jnp.bfloat16),
                        preferred_element_type=jnp.float32)
        z = z + b[None, :]
        z = jnp.maximum(z, 0.0) if activation == "relu" else jax.nn.sigmoid(z)
        h = z.astype(jnp.bfloat16)
    wh, bh = params["head"]
    logits = jnp.dot(h, wh.astype(jnp.bfloat16),
                     preferred_element_type=jnp.float32) + bh[None, :]
    return jax.nn.softmax(logits, axis=-1)


# ----------------------------------------------------------------------------
if __name__ == "__main__":
    # Config: dimensions=[8, 32, 32], activation='relu', head='softmax'
    # (the softmax head maps dimensions[-2] -> dimensions[-1], as in the PyTorch code).
    dimensions = [8, 32, 32]
    activation = "relu"
    num_nodes = 16
    num_edges = 32

    key = jax.random.PRNGKey(0)
    key, kx, ke = jax.random.split(key, 3)

    x = jax.random.normal(kx, (num_nodes, dimensions[0]), jnp.float32)
    edge_index = jax.random.randint(ke, (2, num_edges), 0, num_nodes, jnp.int32)
    a_hat = build_normalized_adjacency(edge_index, num_nodes)

    params = init_params(key, dimensions, dimensions[-2], dimensions[-1])

    out = gcn_forward(params, x, a_hat, activation=activation)
    out = jax.block_until_ready(out)

    ref = gcn_forward_ref(params, x, a_hat, activation=activation)
    assert out.shape == (num_nodes, dimensions[-1])
    # approx reciprocal in the softmax epilogue -> allow ~1e-3-level differences
    assert jnp.allclose(out, ref, atol=3e-3, rtol=3e-3), "mismatch vs reference"

    print("KERNEL_OK")
</pallas_src>

<mosaic_0001>
module attributes {stable_mosaic.version = 11 : i64} {
  func.func @_fused_gcn_kernel(%arg0: memref<16x16xbf16, #tpu.memory_space<vmem>>, %arg1: memref<16x128xbf16, #tpu.memory_space<vmem>>, %arg2: memref<128x128xbf16, #tpu.memory_space<vmem>>, %arg3: memref<1x128xf32, #tpu.memory_space<vmem>>, %arg4: memref<128x128xbf16, #tpu.memory_space<vmem>>, %arg5: memref<1x128xf32, #tpu.memory_space<vmem>>, %arg6: memref<128x128xbf16, #tpu.memory_space<vmem>>, %arg7: memref<1x128xf32, #tpu.memory_space<vmem>>, %arg8: memref<16x128xf32, #tpu.memory_space<vmem>>) attributes {dimension_semantics = [], scalar_prefetch = 0 : i64, scratch_operands = 0 : i64, tpu.core_type = #tpu.core_type<tc>} {
    %c0 = arith.constant 0 : index
    %c0_0 = arith.constant 0 : index
    %0 = vector.load %arg0[%c0, %c0_0] : memref<16x16xbf16, #tpu.memory_space<vmem>>, vector<16x16xbf16>
    %c0_1 = arith.constant 0 : index
    %c0_2 = arith.constant 0 : index
    %1 = vector.load %arg1[%c0_1, %c0_2] : memref<16x128xbf16, #tpu.memory_space<vmem>>, vector<16x128xbf16>
    %c0_3 = arith.constant 0 : index
    %c0_4 = arith.constant 0 : index
    %2 = vector.load %arg2[%c0_3, %c0_4] : memref<128x128xbf16, #tpu.memory_space<vmem>>, vector<128x128xbf16>
    %c0_5 = arith.constant 0 : index
    %c0_6 = arith.constant 0 : index
    %3 = vector.load %arg3[%c0_5, %c0_6] : memref<1x128xf32, #tpu.memory_space<vmem>>, vector<1x128xf32>
    %cst = arith.constant dense<0.000000e+00> : vector<16x128xf32>
    %4 = tpu.matmul %0, %1, %cst {dimension_numbers = #tpu.dot_dimension_numbers<[1], [0], [0], [1], [0, 0, 1, 1], [], []>} : vector<16x16xbf16>, vector<16x128xbf16>, vector<16x128xf32> -> vector<16x128xf32>
    %5 = arith.truncf %4 : vector<16x128xf32> to vector<16x128xbf16>
    %cst_7 = arith.constant dense<0.000000e+00> : vector<16x128xf32>
    %6 = tpu.matmul %5, %2, %cst_7 {dimension_numbers = #tpu.dot_dimension_numbers<[1], [0], [0], [1], [0, 0, 1, 1], [], []>} : vector<16x128xbf16>, vector<128x128xbf16>, vector<16x128xf32> -> vector<16x128xf32>
    %7 = vector.broadcast %3 : vector<1x128xf32> to vector<16x128xf32>
    %8 = arith.addf %6, %7 : vector<16x128xf32>
    %cst_8 = arith.constant 0.000000e+00 : f32
    %9 = vector.broadcast %cst_8 : f32 to vector<16x128xf32>
    %10 = arith.maximumf %8, %9 : vector<16x128xf32>
    %11 = arith.truncf %10 : vector<16x128xf32> to vector<16x128xbf16>
    %c0_9 = arith.constant 0 : index
    %c0_10 = arith.constant 0 : index
    %12 = vector.load %arg4[%c0_9, %c0_10] : memref<128x128xbf16, #tpu.memory_space<vmem>>, vector<128x128xbf16>
    %c0_11 = arith.constant 0 : index
    %c0_12 = arith.constant 0 : index
    %13 = vector.load %arg5[%c0_11, %c0_12] : memref<1x128xf32, #tpu.memory_space<vmem>>, vector<1x128xf32>
    %cst_13 = arith.constant dense<0.000000e+00> : vector<16x128xf32>
    %14 = tpu.matmul %11, %12, %cst_13 {dimension_numbers = #tpu.dot_dimension_numbers<[1], [0], [0], [1], [0, 0, 1, 1], [], []>} : vector<16x128xbf16>, vector<128x128xbf16>, vector<16x128xf32> -> vector<16x128xf32>
    %15 = arith.truncf %14 : vector<16x128xf32> to vector<16x128xbf16>
    %cst_14 = arith.constant dense<0.000000e+00> : vector<16x128xf32>
    %16 = tpu.matmul %0, %15, %cst_14 {dimension_numbers = #tpu.dot_dimension_numbers<[1], [0], [0], [1], [0, 0, 1, 1], [], []>} : vector<16x16xbf16>, vector<16x128xbf16>, vector<16x128xf32> -> vector<16x128xf32>
    %17 = vector.broadcast %13 : vector<1x128xf32> to vector<16x128xf32>
    %18 = arith.addf %16, %17 : vector<16x128xf32>
    %cst_15 = arith.constant 0.000000e+00 : f32
    %19 = vector.broadcast %cst_15 : f32 to vector<16x128xf32>
    %20 = arith.maximumf %18, %19 : vector<16x128xf32>
    %21 = arith.truncf %20 : vector<16x128xf32> to vector<16x128xbf16>
    %c0_16 = arith.constant 0 : index
    %c0_17 = arith.constant 0 : index
    %22 = vector.load %arg6[%c0_16, %c0_17] : memref<128x128xbf16, #tpu.memory_space<vmem>>, vector<128x128xbf16>
    %cst_18 = arith.constant dense<0.000000e+00> : vector<16x128xf32>
    %23 = tpu.matmul %21, %22, %cst_18 {dimension_numbers = #tpu.dot_dimension_numbers<[1], [0], [0], [1], [0, 0, 1, 1], [], []>} : vector<16x128xbf16>, vector<128x128xbf16>, vector<16x128xf32> -> vector<16x128xf32>
    %c0_19 = arith.constant 0 : index
    %c0_20 = arith.constant 0 : index
    %24 = vector.load %arg7[%c0_19, %c0_20] : memref<1x128xf32, #tpu.memory_space<vmem>>, vector<1x128xf32>
    %25 = vector.broadcast %24 : vector<1x128xf32> to vector<16x128xf32>
    %26 = arith.addf %23, %25 : vector<16x128xf32>
    %27 = tpu.iota {dimensions = array<i32: 1>} : vector<16x128xi32>
    %c32_i32 = arith.constant 32 : i32
    %28 = vector.broadcast %c32_i32 : i32 to vector<16x128xi32>
    %29 = arith.cmpi slt, %27, %28 : vector<16x128xi32>
    %cst_21 = arith.constant 0xFF800000 : f32
    %30 = vector.broadcast %cst_21 : f32 to vector<16x128xf32>
    %31 = arith.select %29, %26, %30 : vector<16x128xi1>, vector<16x128xf32>
    %cst_22 = arith.constant dense<0xFF800000> : vector<16xf32>
    %32 = vector.multi_reduction <maximumf>, %31, %cst_22 [1] : vector<16x128xf32> to vector<16xf32>
    %33 = vector.shape_cast %32 : vector<16xf32> to vector<16x1xf32>
    %34 = vector.broadcast %33 : vector<16x1xf32> to vector<16x128xf32>
    %35 = arith.subf %31, %34 : vector<16x128xf32>
    %36 = math.exp %35 : vector<16x128xf32>
    %cst_23 = arith.constant dense<0.000000e+00> : vector<16xf32>
    %37 = vector.multi_reduction <add>, %36, %cst_23 [1] : vector<16x128xf32> to vector<16xf32>
    %38 = vector.shape_cast %37 : vector<16xf32> to vector<16x1xf32>
    %39 = tpu.reciprocal %38 {approx = true} : vector<16x1xf32> -> vector<16x1xf32>
    %40 = vector.broadcast %39 : vector<16x1xf32> to vector<16x128xf32>
    %41 = arith.mulf %36, %40 : vector<16x128xf32>
    %c0_24 = arith.constant 0 : index
    %c0_25 = arith.constant 0 : index
    %42 = vector.load %arg8[%c0_24, %c0_25] : memref<16x128xf32, #tpu.memory_space<vmem>>, vector<16x128xf32>
    tpu.vector_store %arg8[%c0_24, %c0_25], %41 {strides = array<i32>} : memref<16x128xf32, #tpu.memory_space<vmem>>, vector<16x128xf32>,
    return
  }
}

</mosaic_0001>

<llo_original>
// kernel: tpu_custom_call.1
$region0: #{tpu_custom_call.1}
  #allocation0 [shape = 'u32[]', space=smem, size = 0x4, offset = 0x4, fixed_abs, tag = 'smem constant byte address 0x4 - core index']
  #allocation1 [shape = 'u32[144,128]{1,0:T(1,128)}', space=vmem, size = 0x12000, scoped, tag = 'internal scratch']
  %s0 = inlined_call_operand.hbm [shape: bf16[16,16], index: 0, kind: input, shape index: {}]
  %s1 = inlined_call_operand.hbm [shape: bf16[16,128], index: 1, kind: input, shape index: {}]
  %s2 = inlined_call_operand.hbm [shape: bf16[128,128], index: 2, kind: input, shape index: {}]
  %s3 = inlined_call_operand.vmem [shape: f32[1,128], index: 3, kind: input, shape index: {}]
  %s4 = inlined_call_operand.hbm [shape: bf16[128,128], index: 4, kind: input, shape index: {}]
  %s5 = inlined_call_operand.vmem [shape: f32[1,128], index: 5, kind: input, shape index: {}]
  %s6 = inlined_call_operand.hbm [shape: bf16[128,128], index: 6, kind: input, shape index: {}]
  %s7 = inlined_call_operand.vmem [shape: f32[1,128], index: 7, kind: input, shape index: {}]
  %s8 = inlined_call_operand.hbm [shape: f32[16,128], index: 8, kind: output, shape index: {}]
  %s9 = sld [smem:[#allocation0]]
  $region62: #{tpu_custom_call.1} parent=0
    _
  %s11 = ssub.s32 1, %s9
  %s12 = scalar_select 0, %s11, %s9
  $region1: #{tpu_custom_call.1} parent=0
    #allocation2 [shape = 'u8[4096]{0}', space=vmem, size = 0x1000, scoped, tag = 'input window, operand 0, single buffered']
    #allocation3 [shape = 's32[1]{0}', space=sflag, size = 0x4, scoped, tag = 'scoped memory for tpu_custom_call.1']
    #allocation4 [shape = 's32[1]{0}', space=sflag, size = 0x4, scoped, tag = 'scoped memory for tpu_custom_call.1']
    #allocation5 [shape = 'u8[4096]{0}', space=vmem, size = 0x1000, scoped, tag = 'input window, operand 1, single buffered']
    #allocation6 [shape = 's32[1]{0}', space=sflag, size = 0x4, scoped, tag = 'scoped memory for tpu_custom_call.1']
    #allocation7 [shape = 'u8[32768]{0}', space=vmem, size = 0x8000, scoped, tag = 'input window, operand 2, single buffered']
    #allocation8 [shape = 'u8[32768]{0}', space=vmem, size = 0x8000, scoped, tag = 'input window, operand 4, single buffered']
    #allocation9 [shape = 's32[1]{0}', space=sflag, size = 0x4, scoped, tag = 'scoped memory for tpu_custom_call.1']
    #allocation10 [shape = 'u8[32768]{0}', space=vmem, size = 0x8000, scoped, tag = 'input window, operand 6, single buffered']
    #allocation11 [shape = 'u8[8192]{0}', space=vmem, size = 0x2000, scoped, tag = 'output window, operand 0, single buffered']
    %13 = vsyncpa [#allocation3], 0
    %14 = vsyncpa [#allocation6], 0
    %15 = vsyncpa [#allocation9], 0
    %16 = vsyncpa [#allocation4], 0
    // Predicated region
    $region2: #{tpu_custom_call.1} parent=1 // pred_check
      _
    $region3: #{tpu_custom_call.1} parent=1 // pred_check_branch
      %18 = sbr.rel (0) target = $region5
    $region4: #{tpu_custom_call.1} parent=1 // pred_region
      %s20 = ssub.s32 128, 128
      %21 = vsyncadd [#allocation3], %s20
      %s22 = sshll.u32 [#allocation2], 4
      %s23 = int_to_ptr.vmem [resolvable:$true] %s22
      %28 = dma.hbm_to_vmem [thread:$0]  %s0, 128, %s23, [#allocation3], 64, 64, 4
    $region5: #{tpu_custom_call.1} parent=1 // pred_fallthru
      _
    // Predicated region
    $region6: #{tpu_custom_call.1} parent=1 // pred_check
      _
    $region7: #{tpu_custom_call.1} parent=1 // pred_check_branch
      %30 = sbr.rel (0) target = $region9
    $region8: #{tpu_custom_call.1} parent=1 // pred_region
      %s32 = ssub.s32 128, 128
      %33 = vsyncadd [#allocation6], %s32
      %s34 = sshll.u32 [#allocation5], 4
      %s35 = int_to_ptr.vmem [resolvable:$true] %s34
      %40 = dma.hbm_to_vmem [thread:$0]  %s1, 128, %s35, [#allocation6], 64, 64, 4
    $region9: #{tpu_custom_call.1} parent=1 // pred_fallthru
      _
    // Predicated region
    $region10: #{tpu_custom_call.1} parent=1 // pred_check
      _
    $region11: #{tpu_custom_call.1} parent=1 // pred_check_branch
      %42 = sbr.rel (0) target = $region13
    $region12: #{tpu_custom_call.1} parent=1 // pred_region
      %s44 = ssub.s32 1024, 1024
      %45 = vsyncadd [#allocation6], %s44
      %s46 = sshll.u32 [#allocation7], 4
      %s47 = int_to_ptr.vmem [resolvable:$true] %s46
      %52 = dma.hbm_to_vmem [thread:$0]  %s2, 1024, %s47, [#allocation6], 64, 64, 4
    $region13: #{tpu_custom_call.1} parent=1 // pred_fallthru
      _
    // Predicated region
    $region14: #{tpu_custom_call.1} parent=1 // pred_check
      _
    $region15: #{tpu_custom_call.1} parent=1 // pred_check_branch
      %54 = sbr.rel (0) target = $region17
    $region16: #{tpu_custom_call.1} parent=1 // pred_region
      _
    $region17: #{tpu_custom_call.1} parent=1 // pred_fallthru
      _
    // Predicated region
    $region18: #{tpu_custom_call.1} parent=1 // pred_check
      _
    $region19: #{tpu_custom_call.1} parent=1 // pred_check_branch
      %56 = sbr.rel (0) target = $region21
    $region20: #{tpu_custom_call.1} parent=1 // pred_region
      %s58 = ssub.s32 1024, 1024
      %59 = vsyncadd [#allocation9], %s58
      %s60 = sshll.u32 [#allocation8], 4
      %s61 = int_to_ptr.vmem [resolvable:$true] %s60
      %66 = dma.hbm_to_vmem [thread:$0]  %s4, 1024, %s61, [#allocation9], 64, 64, 4
    $region21: #{tpu_custom_call.1} parent=1 // pred_fallthru
      _
    // Predicated region
    $region22: #{tpu_custom_call.1} parent=1 // pred_check
      _
    $region23: #{tpu_custom_call.1} parent=1 // pred_check_branch
      %68 = sbr.rel (0) target = $region25
    $region24: #{tpu_custom_call.1} parent=1 // pred_region
      _
    $region25: #{tpu_custom_call.1} parent=1 // pred_fallthru
      _
    // Predicated region
    $region26: #{tpu_custom_call.1} parent=1 // pred_check
      _
    $region27: #{tpu_custom_call.1} parent=1 // pred_check_branch
      %70 = sbr.rel (0) target = $region29
    $region28: #{tpu_custom_call.1} parent=1 // pred_region
      %s72 = ssub.s32 1024, 1024
      %73 = vsyncadd [#allocation9], %s72
      %s74 = sshll.u32 [#allocation10], 4
      %s75 = int_to_ptr.vmem [resolvable:$true] %s74
      %80 = dma.hbm_to_vmem [thread:$0]  %s6, 1024, %s75, [#allocation9], 64, 64, 4
    $region29: #{tpu_custom_call.1} parent=1 // pred_fallthru
      _
    // Predicated region
    $region30: #{tpu_custom_call.1} parent=1 // pred_check
      _
    $region31: #{tpu_custom_call.1} parent=1 // pred_check_branch
      %82 = sbr.rel (0) target = $region33
    $region32: #{tpu_custom_call.1} parent=1 // pred_region
      _
    $region33: #{tpu_custom_call.1} parent=1 // pred_fallthru
      _
    // Predicated region
    $region34: #{tpu_custom_call.1} parent=1 // pred_check
      _
    $region35: #{tpu_custom_call.1} parent=1 // pred_check_branch
      %84 = sbr.rel (0) target = $region37
    $region36: #{tpu_custom_call.1} parent=1 // pred_region
      %85 = dma.done [#allocation3], 128
    $region37: #{tpu_custom_call.1} parent=1 // pred_fallthru
      _
    // Predicated region
    $region38: #{tpu_custom_call.1} parent=1 // pred_check
      _
    $region39: #{tpu_custom_call.1} parent=1 // pred_check_branch
      %87 = sbr.rel (0) target = $region41
    $region40: #{tpu_custom_call.1} parent=1 // pred_region
      %88 = dma.done [#allocation6], 128
    $region41: #{tpu_custom_call.1} parent=1 // pred_fallthru
      _
    // Predicated region
    $region42: #{tpu_custom_call.1} parent=1 // pred_check
      _
    $region43: #{tpu_custom_call.1} parent=1 // pred_check_branch
      %90 = sbr.rel (0) target = $region45
    $region44: #{tpu_custom_call.1} parent=1 // pred_region
      %91 = dma.done [#allocation6], 1024
    $region45: #{tpu_custom_call.1} parent=1 // pred_fallthru
      _
    // Predicated region
    $region46: #{tpu_custom_call.1} parent=1 // pred_check
      _
    $region47: #{tpu_custom_call.1} parent=1 // pred_check_branch
      %93 = sbr.rel (0) target = $region49
    $region48: #{tpu_custom_call.1} parent=1 // pred_region
      %94 = dma.done [#allocation9], 1024
    $region49: #{tpu_custom_call.1} parent=1 // pred_fallthru
      _
    // Predicated region
    $region50: #{tpu_custom_call.1} parent=1 // pred_check
      _
    $region51: #{tpu_custom_call.1} parent=1 // pred_check_branch
      %96 = sbr.rel (0) target = $region53
    $region52: #{tpu_custom_call.1} parent=1 // pred_region
      %97 = dma.done [#allocation9], 1024
    $region53: #{tpu_custom_call.1} parent=1 // pred_fallthru
      _
    %v99 = vld [vmem:[#allocation2] sm:$0xf]
    %v100 = vld [vmem:[#allocation2 + $0x4] sm:$0xf]
    %v101 = vld [vmem:[#allocation5] sm:$0xf]
    %v102 = vld [vmem:[#allocation5 + $0x4] sm:$0xf]
    %v103 = vld [vmem:[#allocation7] sm:$0xf]
    %v104 = vld [vmem:[#allocation7 + $0x4] sm:$0xf]
    %v105 = vld [vmem:[#allocation7 + $0x8] sm:$0xf]
    %v106 = vld [vmem:[#allocation7 + $0xc] sm:$0xf]
    %v107 = vld [vmem:[#allocation7 + $0x10] sm:$0xf]
    %v108 = vld [vmem:[#allocation7 + $0x14] sm:$0xf]
    %v109 = vld [vmem:[#allocation7 + $0x18] sm:$0xf]
    %v110 = vld [vmem:[#allocation7 + $0x1c] sm:$0xf]
    %v111 = vld [vmem:[#allocation7 + $0x20] sm:$0xf]
    %v112 = vld [vmem:[#allocation7 + $0x24] sm:$0xf]
    %v113 = vld [vmem:[#allocation7 + $0x28] sm:$0xf]
    %v114 = vld [vmem:[#allocation7 + $0x2c] sm:$0xf]
    %v115 = vld [vmem:[#allocation7 + $0x30] sm:$0xf]
    %v116 = vld [vmem:[#allocation7 + $0x34] sm:$0xf]
    %v117 = vld [vmem:[#allocation7 + $0x38] sm:$0xf]
    %v118 = vld [vmem:[#allocation7 + $0x3c] sm:$0xf]
    %v119 = vld [vmem:[%s3] sm:$0x1]
    %v122 = vunpack.c.l.b16 %v99
    %v123 = vunpack.c.l.b16 %v100
    %v124 = vpack.c.b16 %v123, %v122
    %v127 = vunpack.c.l.b16 %v101
    %v128 = vunpack.c.l.b16 %v102
    %v129 = vpack.c.b16 %v128, %v127
    %vm131 = vcmask 130048
    %v133 = vsel %vm131, %v124, 0
    %135 = vmatprep.subr.bf16.mxu0 0
    %136 = vmatpush1.bf16.msra.mxu0 %v129
    %137 = vmatprep.subr.bf16.mxu0 0
    %138 = vmatpush1.bf16.msra.mxu0 0
    %139 = vmatprep.subr.bf16.mxu0 0
    %140 = vmatpush1.bf16.msra.mxu0 0
    %141 = vmatprep.subr.bf16.mxu0 0
    %142 = vmatpush1.bf16.msra.mxu0 0
    %143 = vmatprep.subr.bf16.mxu0 0
    %144 = vmatpush1.bf16.msra.mxu0 0
    %145 = vmatprep.subr.bf16.mxu0 0
    %146 = vmatpush1.bf16.msra.mxu0 0
    %147 = vmatprep.subr.bf16.mxu0 0
    %148 = vmatpush1.bf16.msra.mxu0 0
    %149 = vmatprep.subr.bf16.mxu0 0
    %150 = vmatpush1.bf16.msra.mxu0 0
    %151 = vmatprep.subr.bf16.mxu0 0
    %152 = vmatpush1.bf16.msra.mxu0 0
    %153 = vmatprep.subr.bf16.mxu0 0
    %154 = vmatpush1.bf16.msra.mxu0 0
    %155 = vmatprep.subr.bf16.mxu0 0
    %156 = vmatpush1.bf16.msra.mxu0 0
    %157 = vmatprep.subr.bf16.mxu0 0
    %158 = vmatpush1.bf16.msra.mxu0 0
    %159 = vmatprep.subr.bf16.mxu0 0
    %160 = vmatpush1.bf16.msra.mxu0 0
    %161 = vmatprep.subr.bf16.mxu0 0
    %162 = vmatpush1.bf16.msra.mxu0 0
    %163 = vmatprep.subr.bf16.mxu0 0
    %164 = vmatpush1.bf16.msra.mxu0 0
    %165 = vmatprep.subr.bf16.mxu0 0
    %166 = vmatpush1.bf16.msra.mxu0 0
    %167 = vmatprep.mubr.bf16.mxu0 0
    %168 = vmatmul.mubr.bf16.gmra.mrb[0].mxu0 %v133
    %v169 = vpop.f32.mrb[0].mxu0
    %v170 = vadd.f32 0.0, %v169
    %v171 = vpop.f32.mrb[0].mxu0
    %v172 = vpop.f32.mrb[0].mxu0
    %v173 = vadd.f32 0.0, %v172
    %v174 = vpop.f32.mrb[0].mxu0
    %175 = vdwg.mxu0
    %v176 = vpack.c.bf16 %v173, %v170
    %v178 = vlaneseq
    %v179 = vshrl.u32 %v178, 7
    %v180 = vsub.s32 0, %v179
    %v181 = vrot.slane %v119, %v180
    %v199 = vunpack.c.l.b16 %v103
    %v200 = vunpack.c.l.b16 %v104
    %v201 = vunpack.c.l.b16 %v105
    %v202 = vunpack.c.l.b16 %v106
    %v203 = vunpack.c.l.b16 %v107
    %v204 = vunpack.c.l.b16 %v108
    %v205 = vunpack.c.l.b16 %v109
    %v206 = vunpack.c.l.b16 %v110
    %v207 = vunpack.c.l.b16 %v111
    %v208 = vunpack.c.l.b16 %v112
    %v209 = vunpack.c.l.b16 %v113
    %v210 = vunpack.c.l.b16 %v114
    %v211 = vunpack.c.l.b16 %v115
    %v212 = vunpack.c.l.b16 %v116
    %v213 = vunpack.c.l.b16 %v117
    %v214 = vunpack.c.l.b16 %v118
    %v215 = vpack.c.b16 %v200, %v199
    %v216 = vpack.c.b16 %v202, %v201
    %v217 = vpack.c.b16 %v204, %v203
    %v218 = vpack.c.b16 %v206, %v205
    %v219 = vpack.c.b16 %v208, %v207
    %v220 = vpack.c.b16 %v210, %v209
    %v221 = vpack.c.b16 %v212, %v211
    %v222 = vpack.c.b16 %v214, %v213
    %231 = vmatprep.subr.bf16.mxu0 0
    %232 = vmatpush1.bf16.msra.mxu0 %v215
    %233 = vmatprep.subr.bf16.mxu0 0
    %234 = vmatpush1.bf16.msra.mxu0 %v216
    %235 = vmatprep.subr.bf16.mxu0 0
    %236 = vmatpush1.bf16.msra.mxu0 %v217
    %237 = vmatprep.subr.bf16.mxu0 0
    %238 = vmatpush1.bf16.msra.mxu0 %v218
    %239 = vmatprep.subr.bf16.mxu0 0
    %240 = vmatpush1.bf16.msra.mxu0 %v219
    %241 = vmatprep.subr.bf16.mxu0 0
    %242 = vmatpush1.bf16.msra.mxu0 %v220
    %243 = vmatprep.subr.bf16.mxu0 0
    %244 = vmatpush1.bf16.msra.mxu0 %v221
    %245 = vmatprep.subr.bf16.mxu0 0
    %246 = vmatpush1.bf16.msra.mxu0 %v222
    %247 = vmatprep.subr.bf16.mxu0 0
    %248 = vmatpush1.bf16.msra.mxu0 0
    %249 = vmatprep.subr.bf16.mxu0 0
    %250 = vmatpush1.bf16.msra.mxu0 0
    %251 = vmatprep.subr.bf16.mxu0 0
    %252 = vmatpush1.bf16.msra.mxu0 0
    %253 = vmatprep.subr.bf16.mxu0 0
    %254 = vmatpush1.bf16.msra.mxu0 0
    %255 = vmatprep.subr.bf16.mxu0 0
    %256 = vmatpush1.bf16.msra.mxu0 0
    %257 = vmatprep.subr.bf16.mxu0 0
    %258 = vmatpush1.bf16.msra.mxu0 0
    %259 = vmatprep.subr.bf16.mxu0 0
    %260 = vmatpush1.bf16.msra.mxu0 0
    %261 = vmatprep.subr.bf16.mxu0 0
    %262 = vmatpush1.bf16.msra.mxu0 0
    %263 = vmatprep.mubr.bf16.mxu0 0
    %264 = vmatmul.mubr.bf16.gmra.mrb[0].mxu0 %v176
    %v265 = vpop.f32.mrb[0].mxu0
    %v266 = vadd.f32 %v181, %v265
    %v267 = vpop.f32.mrb[0].mxu0
    %v268 = vpop.f32.mrb[0].mxu0
    %v269 = vadd.f32 %v181, %v268
    %v270 = vpop.f32.mrb[0].mxu0
    %271 = vdwg.mxu0
    %v272 = vmax.f32 %v266, 0.0
    %v273 = vmax.f32 %v269, 0.0
    %v274 = vpack.c.bf16 %v273, %v272
    %v275 = vld [vmem:[#allocation8] sm:$0xf]
    %v276 = vld [vmem:[#allocation8 + $0x4] sm:$0xf]
    %v277 = vld [vmem:[#allocation8 + $0x8] sm:$0xf]
    %v278 = vld [vmem:[#allocation8 + $0xc] sm:$0xf]
    %v279 = vld [vmem:[#allocation8 + $0x10] sm:$0xf]
    %v280 = vld [vmem:[#allocation8 + $0x14] sm:$0xf]
    %v281 = vld [vmem:[#allocation8 + $0x18] sm:$0xf]
    %v282 = vld [vmem:[#allocation8 + $0x1c] sm:$0xf]
    %v283 = vld [vmem:[#allocation8 + $0x20] sm:$0xf]
    %v284 = vld [vmem:[#allocation8 + $0x24] sm:$0xf]
    %v285 = vld [vmem:[#allocation8 + $0x28] sm:$0xf]
    %v286 = vld [vmem:[#allocation8 + $0x2c] sm:$0xf]
    %v287 = vld [vmem:[#allocation8 + $0x30] sm:$0xf]
    %v288 = vld [vmem:[#allocation8 + $0x34] sm:$0xf]
    %v289 = vld [vmem:[#allocation8 + $0x38] sm:$0xf]
    %v290 = vld [vmem:[#allocation8 + $0x3c] sm:$0xf]
    %v291 = vld [vmem:[%s5] sm:$0x1]
    %v308 = vunpack.c.l.b16 %v275
    %v309 = vunpack.c.l.b16 %v276
    %v310 = vunpack.c.l.b16 %v277
    %v311 = vunpack.c.l.b16 %v278
    %v312 = vunpack.c.l.b16 %v279
    %v313 = vunpack.c.l.b16 %v280
    %v314 = vunpack.c.l.b16 %v281
    %v315 = vunpack.c.l.b16 %v282
    %v316 = vunpack.c.l.b16 %v283
    %v317 = vunpack.c.l.b16 %v284
    %v318 = vunpack.c.l.b16 %v285
    %v319 = vunpack.c.l.b16 %v286
    %v320 = vunpack.c.l.b16 %v287
    %v321 = vunpack.c.l.b16 %v288
    %v322 = vunpack.c.l.b16 %v289
    %v323 = vunpack.c.l.b16 %v290
    %v324 = vpack.c.b16 %v309, %v308
    %v325 = vpack.c.b16 %v311, %v310
    %v326 = vpack.c.b16 %v313, %v312
    %v327 = vpack.c.b16 %v315, %v314
    %v328 = vpack.c.b16 %v317, %v316
    %v329 = vpack.c.b16 %v319, %v318
    %v330 = vpack.c.b16 %v321, %v320
    %v331 = vpack.c.b16 %v323, %v322
    %340 = vmatprep.subr.bf16.mxu0 0
    %341 = vmatpush1.bf16.msra.mxu0 %v324
    %342 = vmatprep.subr.bf16.mxu0 0
    %343 = vmatpush1.bf16.msra.mxu0 %v325
    %344 = vmatprep.subr.bf16.mxu0 0
    %345 = vmatpush1.bf16.msra.mxu0 %v326
    %346 = vmatprep.subr.bf16.mxu0 0
    %347 = vmatpush1.bf16.msra.mxu0 %v327
    %348 = vmatprep.subr.bf16.mxu0 0
    %349 = vmatpush1.bf16.msra.mxu0 %v328
    %350 = vmatprep.subr.bf16.mxu0 0
    %351 = vmatpush1.bf16.msra.mxu0 %v329
    %352 = vmatprep.subr.bf16.mxu0 0
    %353 = vmatpush1.bf16.msra.mxu0 %v330
    %354 = vmatprep.subr.bf16.mxu0 0
    %355 = vmatpush1.bf16.msra.mxu0 %v331
    %356 = vmatprep.subr.bf16.mxu0 0
    %357 = vmatpush1.bf16.msra.mxu0 0
    %358 = vmatprep.subr.bf16.mxu0 0
    %359 = vmatpush1.bf16.msra.mxu0 0
    %360 = vmatprep.subr.bf16.mxu0 0
    %361 = vmatpush1.bf16.msra.mxu0 0
    %362 = vmatprep.subr.bf16.mxu0 0
    %363 = vmatpush1.bf16.msra.mxu0 0
    %364 = vmatprep.subr.bf16.mxu0 0
    %365 = vmatpush1.bf16.msra.mxu0 0
    %366 = vmatprep.subr.bf16.mxu0 0
    %367 = vmatpush1.bf16.msra.mxu0 0
    %368 = vmatprep.subr.bf16.mxu0 0
    %369 = vmatpush1.bf16.msra.mxu0 0
    %370 = vmatprep.subr.bf16.mxu0 0
    %371 = vmatpush1.bf16.msra.mxu0 0
    %372 = vmatprep.mubr.bf16.mxu0 0
    %373 = vmatmul.mubr.bf16.gmra.mrb[0].mxu0 %v274
    %v374 = vpop.f32.mrb[0].mxu0
    %v375 = vadd.f32 0.0, %v374
    %v376 = vpop.f32.mrb[0].mxu0
    %v377 = vpop.f32.mrb[0].mxu0
    %v378 = vadd.f32 0.0, %v377
    %v379 = vpop.f32.mrb[0].mxu0
    %380 = vdwg.mxu0
    %v381 = vpack.c.bf16 %v378, %v375
    %v383 = vlaneseq
    %v384 = vshrl.u32 %v383, 7
    %v385 = vsub.s32 0, %v384
    %v386 = vrot.slane %v291, %v385
    %388 = vmatprep.subr.bf16.mxu0 0
    %389 = vmatpush1.bf16.msra.mxu0 %v381
    %390 = vmatprep.subr.bf16.mxu0 0
    %391 = vmatpush1.bf16.msra.mxu0 0
    %392 = vmatprep.subr.bf16.mxu0 0
    %393 = vmatpush1.bf16.msra.mxu0 0
    %394 = vmatprep.subr.bf16.mxu0 0
    %395 = vmatpush1.bf16.msra.mxu0 0
    %396 = vmatprep.subr.bf16.mxu0 0
    %397 = vmatpush1.bf16.msra.mxu0 0
    %398 = vmatprep.subr.bf16.mxu0 0
    %399 = vmatpush1.bf16.msra.mxu0 0
    %400 = vmatprep.subr.bf16.mxu0 0
    %401 = vmatpush1.bf16.msra.mxu0 0
    %402 = vmatprep.subr.bf16.mxu0 0
    %403 = vmatpush1.bf16.msra.mxu0 0
    %404 = vmatprep.subr.bf16.mxu0 0
    %405 = vmatpush1.bf16.msra.mxu0 0
    %406 = vmatprep.subr.bf16.mxu0 0
    %407 = vmatpush1.bf16.msra.mxu0 0
    %408 = vmatprep.subr.bf16.mxu0 0
    %409 = vmatpush1.bf16.msra.mxu0 0
    %410 = vmatprep.subr.bf16.mxu0 0
    %411 = vmatpush1.bf16.msra.mxu0 0
    %412 = vmatprep.subr.bf16.mxu0 0
    %413 = vmatpush1.bf16.msra.mxu0 0
    %414 = vmatprep.subr.bf16.mxu0 0
    %415 = vmatpush1.bf16.msra.mxu0 0
    %416 = vmatprep.subr.bf16.mxu0 0
    %417 = vmatpush1.bf16.msra.mxu0 0
    %418 = vmatprep.subr.bf16.mxu0 0
    %419 = vmatpush1.bf16.msra.mxu0 0
    %420 = vmatprep.mubr.bf16.mxu0 0
    %421 = vmatmul.mubr.bf16.gmra.mrb[0].mxu0 %v133
    %v422 = vpop.f32.mrb[0].mxu0
    %v423 = vadd.f32 %v386, %v422
    %v424 = vpop.f32.mrb[0].mxu0
    %v425 = vpop.f32.mrb[0].mxu0
    %v426 = vadd.f32 %v386, %v425
    %v427 = vpop.f32.mrb[0].mxu0
    %428 = vdwg.mxu0
    %v429 = vmax.f32 %v423, 0.0
    %v430 = vmax.f32 %v426, 0.0
    %v431 = vpack.c.bf16 %v430, %v429
    %v432 = vld [vmem:[#allocation10] sm:$0xf]
    %v433 = vld [vmem:[#allocation10 + $0x4] sm:$0xf]
    %v434 = vld [vmem:[#allocation10 + $0x8] sm:$0xf]
    %v435 = vld [vmem:[#allocation10 + $0xc] sm:$0xf]
    %v436 = vld [vmem:[#allocation10 + $0x10] sm:$0xf]
    %v437 = vld [vmem:[#allocation10 + $0x14] sm:$0xf]
    %v438 = vld [vmem:[#allocation10 + $0x18] sm:$0xf]
    %v439 = vld [vmem:[#allocation10 + $0x1c] sm:$0xf]
    %v440 = vld [vmem:[#allocation10 + $0x20] sm:$0xf]
    %v441 = vld [vmem:[#allocation10 + $0x24] sm:$0xf]
    %v442 = vld [vmem:[#allocation10 + $0x28] sm:$0xf]
    %v443 = vld [vmem:[#allocation10 + $0x2c] sm:$0xf]
    %v444 = vld [vmem:[#allocation10 + $0x30] sm:$0xf]
    %v445 = vld [vmem:[#allocation10 + $0x34] sm:$0xf]
    %v446 = vld [vmem:[#allocation10 + $0x38] sm:$0xf]
    %v447 = vld [vmem:[#allocation10 + $0x3c] sm:$0xf]
    %v448 = vld [vmem:[%s7] sm:$0x1]
    %v450 = vlaneseq
    %v451 = vshrl.u32 %v450, 7
    %v452 = vsub.s32 0, %v451
    %v453 = vrot.slane %v448, %v452
    %v471 = vunpack.c.l.b16 %v432
    %v472 = vunpack.c.l.b16 %v433
    %v473 = vunpack.c.l.b16 %v434
    %v474 = vunpack.c.l.b16 %v435
    %v475 = vunpack.c.l.b16 %v436
    %v476 = vunpack.c.l.b16 %v437
    %v477 = vunpack.c.l.b16 %v438
    %v478 = vunpack.c.l.b16 %v439
    %v479 = vunpack.c.l.b16 %v440
    %v480 = vunpack.c.l.b16 %v441
    %v481 = vunpack.c.l.b16 %v442
    %v482 = vunpack.c.l.b16 %v443
    %v483 = vunpack.c.l.b16 %v444
    %v484 = vunpack.c.l.b16 %v445
    %v485 = vunpack.c.l.b16 %v446
    %v486 = vunpack.c.l.b16 %v447
    %v487 = vpack.c.b16 %v472, %v471
    %v488 = vpack.c.b16 %v474, %v473
    %v489 = vpack.c.b16 %v476, %v475
    %v490 = vpack.c.b16 %v478, %v477
    %v491 = vpack.c.b16 %v480, %v479
    %v492 = vpack.c.b16 %v482, %v481
    %v493 = vpack.c.b16 %v484, %v483
    %v494 = vpack.c.b16 %v486, %v485
    %503 = vmatprep.subr.bf16.mxu0 0
    %504 = vmatpush1.bf16.msra.mxu0 %v487
    %505 = vmatprep.subr.bf16.mxu0 0
    %506 = vmatpush1.bf16.msra.mxu0 %v488
    %507 = vmatprep.subr.bf16.mxu0 0
    %508 = vmatpush1.bf16.msra.mxu0 %v489
    %509 = vmatprep.subr.bf16.mxu0 0
    %510 = vmatpush1.bf16.msra.mxu0 %v490
    %511 = vmatprep.subr.bf16.mxu0 0
    %512 = vmatpush1.bf16.msra.mxu0 %v491
    %513 = vmatprep.subr.bf16.mxu0 0
    %514 = vmatpush1.bf16.msra.mxu0 %v492
    %515 = vmatprep.subr.bf16.mxu0 0
    %516 = vmatpush1.bf16.msra.mxu0 %v493
    %517 = vmatprep.subr.bf16.mxu0 0
    %518 = vmatpush1.bf16.msra.mxu0 %v494
    %519 = vmatprep.subr.bf16.mxu0 0
    %520 = vmatpush1.bf16.msra.mxu0 0
    %521 = vmatprep.subr.bf16.mxu0 0
    %522 = vmatpush1.bf16.msra.mxu0 0
    %523 = vmatprep.subr.bf16.mxu0 0
    %524 = vmatpush1.bf16.msra.mxu0 0
    %525 = vmatprep.subr.bf16.mxu0 0
    %526 = vmatpush1.bf16.msra.mxu0 0
    %527 = vmatprep.subr.bf16.mxu0 0
    %528 = vmatpush1.bf16.msra.mxu0 0
    %529 = vmatprep.subr.bf16.mxu0 0
    %530 = vmatpush1.bf16.msra.mxu0 0
    %531 = vmatprep.subr.bf16.mxu0 0
    %532 = vmatpush1.bf16.msra.mxu0 0
    %533 = vmatprep.subr.bf16.mxu0 0
    %534 = vmatpush1.bf16.msra.mxu0 0
    %535 = vmatprep.mubr.bf16.mxu0 0
    %536 = vmatmul.mubr.bf16.gmra.mrb[0].mxu0 %v431
    %v537 = vpop.f32.mrb[0].mxu0
    %v538 = vadd.f32 %v453, %v537
    %v539 = vpop.f32.mrb[0].mxu0
    %v540 = vpop.f32.mrb[0].mxu0
    %v541 = vadd.f32 %v453, %v540
    %v542 = vpop.f32.mrb[0].mxu0
    %543 = vdwg.mxu0
    %v544 = vlaneseq
    %v545 = vand.u32 %v544, 127
    %vm546 = vcmp.lt.s32.totalorder %v545, 32
    %v547 = vsel %vm546, %v538, -inf
    %v548 = vsel %vm546, %v541, -inf
    %549 = vmax.xlane.f32.xlu0 %v547
    %v550 = vpop.xlane.xlu0 %549
    %551 = vmax.xlane.f32.xlu0 %v548
    %v552 = vpop.xlane.xlu0 %551
    %v553 = vsub.f32 %v547, %v550
    %v554 = vsub.f32 %v548, %v552
    %v555 = vmul.f32 %v553, 1.442695
    %v556 = vpow.pop %v555
    %v557 = vmul.f32 %v554, 1.442695
    %v558 = vpow.pop %v557
    %559 = vadd.xlane.f32.xlu0 %v556
    %v560 = vpop.xlane.xlu0 %559
    %561 = vadd.xlane.f32.xlu0 %v558
    %v562 = vpop.xlane.xlu0 %561
    %v563 = vrcp.pop %v560
    %v564 = vrcp.pop %v562
    %v565 = vmul.f32 %v556, %v563
    %v566 = vmul.f32 %v558, %v564
    %567 = vst [vmem:[#allocation11] sm:$0xff] %v565
    %568 = vst [vmem:[#allocation11 + $0x8] sm:$0xff] %v566
    // Predicated region
    $region54: #{tpu_custom_call.1} parent=1 // pred_check
      _
    $region55: #{tpu_custom_call.1} parent=1 // pred_check_branch
      %570 = sbr.rel (0) target = $region57
    $region56: #{tpu_custom_call.1} parent=1 // pred_region
      %s572 = ssub.s32 256, 256
      %573 = vsyncadd [#allocation4], %s572
      %s574 = sshll.u32 [#allocation11], 4
      %s575 = int_to_ptr.vmem [resolvable:$true] %s574
      %580 = dma.vmem_to_hbm [thread:$0]  %s575, 256, %s8, [#allocation4], 128, 128, 8
    $region57: #{tpu_custom_call.1} parent=1 // pred_fallthru
      _
    // Predicated region
    $region58: #{tpu_custom_call.1} parent=1 // pred_check
      _
    $region59: #{tpu_custom_call.1} parent=1 // pred_check_branch
      %582 = sbr.rel (0) target = $region61
    $region60: #{tpu_custom_call.1} parent=1 // pred_region
      %583 = dma.done [#allocation4], 256
    $region61: #{tpu_custom_call.1} parent=1 // pred_fallthru
      _
    %584 = vsyncpa [#allocation3], 1
    %585 = vsyncpa [#allocation6], 1
    %586 = vsyncpa [#allocation9], 1
    %587 = vsyncpa [#allocation4], 1

</llo_original>
